<compile_context>
chip_gen: v6e
topology: v6e:2x2x1
jax: 0.10.0
libtpu: 0.0.40
codegen_flags: <defaults>
</compile_context>

<pallas_src>
import jax
import jax.numpy as jnp
from jax import lax
from jax.experimental import pallas as pl
from jax.experimental.pallas import tpu as pltpu


def _lstm_kernel(x_ref, wih_ref, whh_ref, b_ref, wlin_ref, blin_ref,
                 h0_ref, c0_ref, out_ref):
    """Full LSTM recurrence + output projection for one sequence.

    x_ref     : (seq, in)      VMEM
    wih_ref   : (in, 4H)       VMEM  (W_ih^T, fused gates [i,f,g,o])
    whh_ref   : (H, 4H)        VMEM  (W_hh^T, fused gates [i,f,g,o])
    b_ref     : (1, 4H)        VMEM  (b_ih + b_hh, fused)
    wlin_ref  : (H, out)       VMEM  (W_linear^T)
    blin_ref  : (1, out)       VMEM
    h0_ref    : (1, H)         VMEM
    c0_ref    : (1, H)         VMEM
    out_ref   : (seq, out)     VMEM
    """
    seq, in_size = x_ref.shape
    hidden, four_h = whh_ref.shape

    # ---- Hoisted, fused input projection -> lane-dense (seq, 4H). ----------
    x = x_ref[...]                                               # (seq, in)
    if in_size == 1:
        # K=1 matmul would waste the MXU: a single VPU broadcast mul instead.
        gx = x * wih_ref[...] + b_ref[...]                       # (seq, 4H)
    else:
        gx = (jnp.dot(x, wih_ref[...], preferred_element_type=jnp.float32)
              + b_ref[...])                                      # (seq, 4H)

    whh = whh_ref[...]                                           # (H, 4H), load once

    # Static lane mask selecting the g-gate block (lanes [2H, 3H)).
    lane = lax.broadcasted_iota(jnp.int32, (1, four_h), 1)
    g_mask = (lane >= 2 * hidden) & (lane < 3 * hidden)

    # ---- Serial recurrence: h/c live in registers, statically unrolled. ----
    h = h0_ref[...]                                              # (1, H)
    c = c0_ref[...]                                              # (1, H)
    hs = []
    for t in range(seq):                                         # static trip count
        # One fused MXU dot per step; N = 4H fills the lane width.
        pre = gx[t:t + 1, :] + jnp.dot(h, whh,
                                       preferred_element_type=jnp.float32)
        # Full-width activations + one select (i,f,o: sigmoid; g: tanh).
        act = jnp.where(g_mask, jnp.tanh(pre), jax.nn.sigmoid(pre))  # (1, 4H)

        i_g = act[:, 0 * hidden:1 * hidden]
        f_g = act[:, 1 * hidden:2 * hidden]
        g_g = act[:, 2 * hidden:3 * hidden]
        o_g = act[:, 3 * hidden:4 * hidden]

        c = f_g * c + i_g * g_g                                  # (1, H)
        h = o_g * jnp.tanh(c)                                    # (1, H)
        hs.append(h)

    # ---- Hoisted output projection: one matmul + a single output store. ----
    h_all = jnp.concatenate(hs, axis=0)                          # (seq, H)
    out_ref[...] = (jnp.dot(h_all, wlin_ref[...],
                            preferred_element_type=jnp.float32)
                    + blin_ref[...]).astype(out_ref.dtype)


@jax.jit
def lstm_forward(x, w_ih, w_hh, b_ih, b_hh, w_lin, b_lin, h0, c0):
    """x: (seq, input_size) float32 -> (seq, output_size) float32."""
    seq, _ = x.shape
    hidden = w_hh.shape[1]
    out_size = w_lin.shape[0]

    # Glue (plain JAX): PyTorch weights are (4H, K) with rows stacked in gate
    # order [i, f, g, o]; a single transpose gives the fused (K, 4H) layout
    # the kernel wants (gates stacked along N / the lane dimension).
    wih_t = jnp.transpose(w_ih)                       # (in, 4H)
    whh_t = jnp.transpose(w_hh)                       # (H, 4H)
    b = (b_ih + b_hh).reshape(1, 4 * hidden)          # (1, 4H)
    wlin_t = jnp.transpose(w_lin)                     # (H, out)
    blin = b_lin.reshape(1, -1)                       # (1, out)
    h0_2d = h0.reshape(1, hidden)
    c0_2d = c0.reshape(1, hidden)

    vmem = pl.BlockSpec(memory_space=pltpu.MemorySpace.VMEM)
    return pl.pallas_call(
        _lstm_kernel,
        out_shape=jax.ShapeDtypeStruct((seq, out_size), jnp.float32),
        in_specs=[vmem] * 8,
        out_specs=vmem,
    )(x, wih_t, whh_t, b, wlin_t, blin, h0_2d, c0_2d)


def _reference_lstm(x, w_ih, w_hh, b_ih, b_hh, w_lin, b_lin, h0, c0):
    """Pure-JAX reference matching PyTorch nn.LSTM semantics."""
    H = w_hh.shape[1]
    h, c = h0.reshape(1, H), c0.reshape(1, H)
    outs = []
    for t in range(x.shape[0]):
        x_t = x[t:t + 1]                                       # (1, in)
        gates = x_t @ w_ih.T + b_ih + h @ w_hh.T + b_hh        # (1, 4H)
        i = jax.nn.sigmoid(gates[:, 0:H])
        f = jax.nn.sigmoid(gates[:, H:2 * H])
        g = jnp.tanh(gates[:, 2 * H:3 * H])
        o = jax.nn.sigmoid(gates[:, 3 * H:4 * H])
        c = f * c + i * g
        h = o * jnp.tanh(c)
        outs.append(h @ w_lin.T + b_lin)
    return jnp.concatenate(outs, axis=0)


if __name__ == "__main__":
    # Small shapes consistent with the module's forward:
    #   input_seq -> view(seq, 1, input_size); predictions: (seq, output_size)
    seq_len = 8
    input_size = 1
    hidden = 32
    output_size = 5

    key = jax.random.PRNGKey(0)
    k = jax.random.split(key, 8)
    scale = 1.0 / jnp.sqrt(hidden)

    x = jax.random.normal(k[0], (seq_len, input_size), dtype=jnp.float32)
    w_ih = jax.random.uniform(k[1], (4 * hidden, input_size), jnp.float32, -scale, scale)
    w_hh = jax.random.uniform(k[2], (4 * hidden, hidden), jnp.float32, -scale, scale)
    b_ih = jax.random.uniform(k[3], (4 * hidden,), jnp.float32, -scale, scale)
    b_hh = jax.random.uniform(k[4], (4 * hidden,), jnp.float32, -scale, scale)
    w_lin = jax.random.uniform(k[5], (output_size, hidden), jnp.float32, -scale, scale)
    b_lin = jax.random.uniform(k[6], (output_size,), jnp.float32, -scale, scale)
    # Module initializes hidden_cell to zeros of shape (1, 1, H).
    h0 = jnp.zeros((hidden,), jnp.float32)
    c0 = jnp.zeros((hidden,), jnp.float32)

    out = lstm_forward(x, w_ih, w_hh, b_ih, b_hh, w_lin, b_lin, h0, c0)
    out = jax.block_until_ready(out)

    ref = _reference_lstm(x, w_ih, w_hh, b_ih, b_hh, w_lin, b_lin, h0, c0)
    assert out.shape == (seq_len, output_size)
    assert jnp.allclose(out, ref, atol=1e-5, rtol=1e-5), "mismatch vs reference"
    print("KERNEL_OK")
</pallas_src>

<mosaic_0001>
module attributes {stable_mosaic.version = 11 : i64} {
  func.func @_lstm_kernel(%arg0: memref<8x1xf32, #tpu.memory_space<vmem>>, %arg1: memref<1x128xf32, #tpu.memory_space<vmem>>, %arg2: memref<32x128xf32, #tpu.memory_space<vmem>>, %arg3: memref<1x128xf32, #tpu.memory_space<vmem>>, %arg4: memref<32x5xf32, #tpu.memory_space<vmem>>, %arg5: memref<1x5xf32, #tpu.memory_space<vmem>>, %arg6: memref<1x32xf32, #tpu.memory_space<vmem>>, %arg7: memref<1x32xf32, #tpu.memory_space<vmem>>, %arg8: memref<8x5xf32, #tpu.memory_space<vmem>>) attributes {dimension_semantics = [], scalar_prefetch = 0 : i64, scratch_operands = 0 : i64, tpu.core_type = #tpu.core_type<tc>} {
    %c0 = arith.constant 0 : index
    %c0_0 = arith.constant 0 : index
    %0 = vector.load %arg0[%c0, %c0_0] : memref<8x1xf32, #tpu.memory_space<vmem>>, vector<8x1xf32>
    %c0_1 = arith.constant 0 : index
    %c0_2 = arith.constant 0 : index
    %1 = vector.load %arg1[%c0_1, %c0_2] : memref<1x128xf32, #tpu.memory_space<vmem>>, vector<1x128xf32>
    %2 = vector.broadcast %0 : vector<8x1xf32> to vector<8x128xf32>
    %3 = vector.broadcast %1 : vector<1x128xf32> to vector<8x128xf32>
    %4 = arith.mulf %2, %3 : vector<8x128xf32>
    %c0_3 = arith.constant 0 : index
    %c0_4 = arith.constant 0 : index
    %5 = vector.load %arg3[%c0_3, %c0_4] : memref<1x128xf32, #tpu.memory_space<vmem>>, vector<1x128xf32>
    %6 = vector.broadcast %5 : vector<1x128xf32> to vector<8x128xf32>
    %7 = arith.addf %4, %6 : vector<8x128xf32>
    %c0_5 = arith.constant 0 : index
    %c0_6 = arith.constant 0 : index
    %8 = vector.load %arg2[%c0_5, %c0_6] : memref<32x128xf32, #tpu.memory_space<vmem>>, vector<32x128xf32>
    %9 = tpu.iota {dimensions = array<i32: 1>} : vector<1x128xi32>
    %c64_i32 = arith.constant 64 : i32
    %10 = vector.broadcast %c64_i32 : i32 to vector<1x128xi32>
    %11 = arith.cmpi sge, %9, %10 : vector<1x128xi32>
    %c96_i32 = arith.constant 96 : i32
    %12 = vector.broadcast %c96_i32 : i32 to vector<1x128xi32>
    %13 = arith.cmpi slt, %9, %12 : vector<1x128xi32>
    %14 = arith.andi %11, %13 : vector<1x128xi1>
    %c0_7 = arith.constant 0 : index
    %c0_8 = arith.constant 0 : index
    %15 = vector.load %arg6[%c0_7, %c0_8] : memref<1x32xf32, #tpu.memory_space<vmem>>, vector<1x32xf32>
    %c0_9 = arith.constant 0 : index
    %c0_10 = arith.constant 0 : index
    %16 = vector.load %arg7[%c0_9, %c0_10] : memref<1x32xf32, #tpu.memory_space<vmem>>, vector<1x32xf32>
    %17 = vector.extract_strided_slice %7 {offsets = [0, 0], sizes = [1, 128], strides = [1, 1]} : vector<8x128xf32> to vector<1x128xf32>
    %cst = arith.constant dense<0.000000e+00> : vector<1x128xf32>
    %18 = tpu.matmul %15, %8, %cst {dimension_numbers = #tpu.dot_dimension_numbers<[1], [0], [0], [1], [0, 0, 1, 1], [], []>} : vector<1x32xf32>, vector<32x128xf32>, vector<1x128xf32> -> vector<1x128xf32>
    %19 = arith.addf %17, %18 : vector<1x128xf32>
    %20 = math.tanh %19 : vector<1x128xf32>
    %21 = arith.negf %19 : vector<1x128xf32>
    %22 = math.exp %21 : vector<1x128xf32>
    %cst_11 = arith.constant 1.000000e+00 : f32
    %23 = vector.broadcast %cst_11 : f32 to vector<1x128xf32>
    %24 = arith.addf %23, %22 : vector<1x128xf32>
    %25 = arith.divf %23, %24 : vector<1x128xf32>
    %26 = arith.select %14, %20, %25 : vector<1x128xi1>, vector<1x128xf32>
    %27 = vector.extract_strided_slice %26 {offsets = [0, 0], sizes = [1, 32], strides = [1, 1]} : vector<1x128xf32> to vector<1x32xf32>
    %28 = vector.extract_strided_slice %26 {offsets = [0, 32], sizes = [1, 32], strides = [1, 1]} : vector<1x128xf32> to vector<1x32xf32>
    %29 = vector.extract_strided_slice %26 {offsets = [0, 64], sizes = [1, 32], strides = [1, 1]} : vector<1x128xf32> to vector<1x32xf32>
    %30 = vector.extract_strided_slice %26 {offsets = [0, 96], sizes = [1, 32], strides = [1, 1]} : vector<1x128xf32> to vector<1x32xf32>
    %31 = arith.mulf %28, %16 : vector<1x32xf32>
    %32 = arith.mulf %27, %29 : vector<1x32xf32>
    %33 = arith.addf %31, %32 : vector<1x32xf32>
    %34 = math.tanh %33 : vector<1x32xf32>
    %35 = arith.mulf %30, %34 : vector<1x32xf32>
    %36 = vector.extract_strided_slice %7 {offsets = [1, 0], sizes = [1, 128], strides = [1, 1]} : vector<8x128xf32> to vector<1x128xf32>
    %cst_12 = arith.constant dense<0.000000e+00> : vector<1x128xf32>
    %37 = tpu.matmul %35, %8, %cst_12 {dimension_numbers = #tpu.dot_dimension_numbers<[1], [0], [0], [1], [0, 0, 1, 1], [], []>} : vector<1x32xf32>, vector<32x128xf32>, vector<1x128xf32> -> vector<1x128xf32>
    %38 = arith.addf %36, %37 : vector<1x128xf32>
    %39 = math.tanh %38 : vector<1x128xf32>
    %40 = arith.negf %38 : vector<1x128xf32>
    %41 = math.exp %40 : vector<1x128xf32>
    %cst_13 = arith.constant 1.000000e+00 : f32
    %42 = vector.broadcast %cst_13 : f32 to vector<1x128xf32>
    %43 = arith.addf %42, %41 : vector<1x128xf32>
    %44 = arith.divf %42, %43 : vector<1x128xf32>
    %45 = arith.select %14, %39, %44 : vector<1x128xi1>, vector<1x128xf32>
    %46 = vector.extract_strided_slice %45 {offsets = [0, 0], sizes = [1, 32], strides = [1, 1]} : vector<1x128xf32> to vector<1x32xf32>
    %47 = vector.extract_strided_slice %45 {offsets = [0, 32], sizes = [1, 32], strides = [1, 1]} : vector<1x128xf32> to vector<1x32xf32>
    %48 = vector.extract_strided_slice %45 {offsets = [0, 64], sizes = [1, 32], strides = [1, 1]} : vector<1x128xf32> to vector<1x32xf32>
    %49 = vector.extract_strided_slice %45 {offsets = [0, 96], sizes = [1, 32], strides = [1, 1]} : vector<1x128xf32> to vector<1x32xf32>
    %50 = arith.mulf %47, %33 : vector<1x32xf32>
    %51 = arith.mulf %46, %48 : vector<1x32xf32>
    %52 = arith.addf %50, %51 : vector<1x32xf32>
    %53 = math.tanh %52 : vector<1x32xf32>
    %54 = arith.mulf %49, %53 : vector<1x32xf32>
    %55 = vector.extract_strided_slice %7 {offsets = [2, 0], sizes = [1, 128], strides = [1, 1]} : vector<8x128xf32> to vector<1x128xf32>
    %cst_14 = arith.constant dense<0.000000e+00> : vector<1x128xf32>
    %56 = tpu.matmul %54, %8, %cst_14 {dimension_numbers = #tpu.dot_dimension_numbers<[1], [0], [0], [1], [0, 0, 1, 1], [], []>} : vector<1x32xf32>, vector<32x128xf32>, vector<1x128xf32> -> vector<1x128xf32>
    %57 = arith.addf %55, %56 : vector<1x128xf32>
    %58 = math.tanh %57 : vector<1x128xf32>
    %59 = arith.negf %57 : vector<1x128xf32>
    %60 = math.exp %59 : vector<1x128xf32>
    %cst_15 = arith.constant 1.000000e+00 : f32
    %61 = vector.broadcast %cst_15 : f32 to vector<1x128xf32>
    %62 = arith.addf %61, %60 : vector<1x128xf32>
    %63 = arith.divf %61, %62 : vector<1x128xf32>
    %64 = arith.select %14, %58, %63 : vector<1x128xi1>, vector<1x128xf32>
    %65 = vector.extract_strided_slice %64 {offsets = [0, 0], sizes = [1, 32], strides = [1, 1]} : vector<1x128xf32> to vector<1x32xf32>
    %66 = vector.extract_strided_slice %64 {offsets = [0, 32], sizes = [1, 32], strides = [1, 1]} : vector<1x128xf32> to vector<1x32xf32>
    %67 = vector.extract_strided_slice %64 {offsets = [0, 64], sizes = [1, 32], strides = [1, 1]} : vector<1x128xf32> to vector<1x32xf32>
    %68 = vector.extract_strided_slice %64 {offsets = [0, 96], sizes = [1, 32], strides = [1, 1]} : vector<1x128xf32> to vector<1x32xf32>
    %69 = arith.mulf %66, %52 : vector<1x32xf32>
    %70 = arith.mulf %65, %67 : vector<1x32xf32>
    %71 = arith.addf %69, %70 : vector<1x32xf32>
    %72 = math.tanh %71 : vector<1x32xf32>
    %73 = arith.mulf %68, %72 : vector<1x32xf32>
    %74 = vector.extract_strided_slice %7 {offsets = [3, 0], sizes = [1, 128], strides = [1, 1]} : vector<8x128xf32> to vector<1x128xf32>
    %cst_16 = arith.constant dense<0.000000e+00> : vector<1x128xf32>
    %75 = tpu.matmul %73, %8, %cst_16 {dimension_numbers = #tpu.dot_dimension_numbers<[1], [0], [0], [1], [0, 0, 1, 1], [], []>} : vector<1x32xf32>, vector<32x128xf32>, vector<1x128xf32> -> vector<1x128xf32>
    %76 = arith.addf %74, %75 : vector<1x128xf32>
    %77 = math.tanh %76 : vector<1x128xf32>
    %78 = arith.negf %76 : vector<1x128xf32>
    %79 = math.exp %78 : vector<1x128xf32>
    %cst_17 = arith.constant 1.000000e+00 : f32
    %80 = vector.broadcast %cst_17 : f32 to vector<1x128xf32>
    %81 = arith.addf %80, %79 : vector<1x128xf32>
    %82 = arith.divf %80, %81 : vector<1x128xf32>
    %83 = arith.select %14, %77, %82 : vector<1x128xi1>, vector<1x128xf32>
    %84 = vector.extract_strided_slice %83 {offsets = [0, 0], sizes = [1, 32], strides = [1, 1]} : vector<1x128xf32> to vector<1x32xf32>
    %85 = vector.extract_strided_slice %83 {offsets = [0, 32], sizes = [1, 32], strides = [1, 1]} : vector<1x128xf32> to vector<1x32xf32>
    %86 = vector.extract_strided_slice %83 {offsets = [0, 64], sizes = [1, 32], strides = [1, 1]} : vector<1x128xf32> to vector<1x32xf32>
    %87 = vector.extract_strided_slice %83 {offsets = [0, 96], sizes = [1, 32], strides = [1, 1]} : vector<1x128xf32> to vector<1x32xf32>
    %88 = arith.mulf %85, %71 : vector<1x32xf32>
    %89 = arith.mulf %84, %86 : vector<1x32xf32>
    %90 = arith.addf %88, %89 : vector<1x32xf32>
    %91 = math.tanh %90 : vector<1x32xf32>
    %92 = arith.mulf %87, %91 : vector<1x32xf32>
    %93 = vector.extract_strided_slice %7 {offsets = [4, 0], sizes = [1, 128], strides = [1, 1]} : vector<8x128xf32> to vector<1x128xf32>
    %cst_18 = arith.constant dense<0.000000e+00> : vector<1x128xf32>
    %94 = tpu.matmul %92, %8, %cst_18 {dimension_numbers = #tpu.dot_dimension_numbers<[1], [0], [0], [1], [0, 0, 1, 1], [], []>} : vector<1x32xf32>, vector<32x128xf32>, vector<1x128xf32> -> vector<1x128xf32>
    %95 = arith.addf %93, %94 : vector<1x128xf32>
    %96 = math.tanh %95 : vector<1x128xf32>
    %97 = arith.negf %95 : vector<1x128xf32>
    %98 = math.exp %97 : vector<1x128xf32>
    %cst_19 = arith.constant 1.000000e+00 : f32
    %99 = vector.broadcast %cst_19 : f32 to vector<1x128xf32>
    %100 = arith.addf %99, %98 : vector<1x128xf32>
    %101 = arith.divf %99, %100 : vector<1x128xf32>
    %102 = arith.select %14, %96, %101 : vector<1x128xi1>, vector<1x128xf32>
    %103 = vector.extract_strided_slice %102 {offsets = [0, 0], sizes = [1, 32], strides = [1, 1]} : vector<1x128xf32> to vector<1x32xf32>
    %104 = vector.extract_strided_slice %102 {offsets = [0, 32], sizes = [1, 32], strides = [1, 1]} : vector<1x128xf32> to vector<1x32xf32>
    %105 = vector.extract_strided_slice %102 {offsets = [0, 64], sizes = [1, 32], strides = [1, 1]} : vector<1x128xf32> to vector<1x32xf32>
    %106 = vector.extract_strided_slice %102 {offsets = [0, 96], sizes = [1, 32], strides = [1, 1]} : vector<1x128xf32> to vector<1x32xf32>
    %107 = arith.mulf %104, %90 : vector<1x32xf32>
    %108 = arith.mulf %103, %105 : vector<1x32xf32>
    %109 = arith.addf %107, %108 : vector<1x32xf32>
    %110 = math.tanh %109 : vector<1x32xf32>
    %111 = arith.mulf %106, %110 : vector<1x32xf32>
    %112 = vector.extract_strided_slice %7 {offsets = [5, 0], sizes = [1, 128], strides = [1, 1]} : vector<8x128xf32> to vector<1x128xf32>
    %cst_20 = arith.constant dense<0.000000e+00> : vector<1x128xf32>
    %113 = tpu.matmul %111, %8, %cst_20 {dimension_numbers = #tpu.dot_dimension_numbers<[1], [0], [0], [1], [0, 0, 1, 1], [], []>} : vector<1x32xf32>, vector<32x128xf32>, vector<1x128xf32> -> vector<1x128xf32>
    %114 = arith.addf %112, %113 : vector<1x128xf32>
    %115 = math.tanh %114 : vector<1x128xf32>
    %116 = arith.negf %114 : vector<1x128xf32>
    %117 = math.exp %116 : vector<1x128xf32>
    %cst_21 = arith.constant 1.000000e+00 : f32
    %118 = vector.broadcast %cst_21 : f32 to vector<1x128xf32>
    %119 = arith.addf %118, %117 : vector<1x128xf32>
    %120 = arith.divf %118, %119 : vector<1x128xf32>
    %121 = arith.select %14, %115, %120 : vector<1x128xi1>, vector<1x128xf32>
    %122 = vector.extract_strided_slice %121 {offsets = [0, 0], sizes = [1, 32], strides = [1, 1]} : vector<1x128xf32> to vector<1x32xf32>
    %123 = vector.extract_strided_slice %121 {offsets = [0, 32], sizes = [1, 32], strides = [1, 1]} : vector<1x128xf32> to vector<1x32xf32>
    %124 = vector.extract_strided_slice %121 {offsets = [0, 64], sizes = [1, 32], strides = [1, 1]} : vector<1x128xf32> to vector<1x32xf32>
    %125 = vector.extract_strided_slice %121 {offsets = [0, 96], sizes = [1, 32], strides = [1, 1]} : vector<1x128xf32> to vector<1x32xf32>
    %126 = arith.mulf %123, %109 : vector<1x32xf32>
    %127 = arith.mulf %122, %124 : vector<1x32xf32>
    %128 = arith.addf %126, %127 : vector<1x32xf32>
    %129 = math.tanh %128 : vector<1x32xf32>
    %130 = arith.mulf %125, %129 : vector<1x32xf32>
    %131 = vector.extract_strided_slice %7 {offsets = [6, 0], sizes = [1, 128], strides = [1, 1]} : vector<8x128xf32> to vector<1x128xf32>
    %cst_22 = arith.constant dense<0.000000e+00> : vector<1x128xf32>
    %132 = tpu.matmul %130, %8, %cst_22 {dimension_numbers = #tpu.dot_dimension_numbers<[1], [0], [0], [1], [0, 0, 1, 1], [], []>} : vector<1x32xf32>, vector<32x128xf32>, vector<1x128xf32> -> vector<1x128xf32>
    %133 = arith.addf %131, %132 : vector<1x128xf32>
    %134 = math.tanh %133 : vector<1x128xf32>
    %135 = arith.negf %133 : vector<1x128xf32>
    %136 = math.exp %135 : vector<1x128xf32>
    %cst_23 = arith.constant 1.000000e+00 : f32
    %137 = vector.broadcast %cst_23 : f32 to vector<1x128xf32>
    %138 = arith.addf %137, %136 : vector<1x128xf32>
    %139 = arith.divf %137, %138 : vector<1x128xf32>
    %140 = arith.select %14, %134, %139 : vector<1x128xi1>, vector<1x128xf32>
    %141 = vector.extract_strided_slice %140 {offsets = [0, 0], sizes = [1, 32], strides = [1, 1]} : vector<1x128xf32> to vector<1x32xf32>
    %142 = vector.extract_strided_slice %140 {offsets = [0, 32], sizes = [1, 32], strides = [1, 1]} : vector<1x128xf32> to vector<1x32xf32>
    %143 = vector.extract_strided_slice %140 {offsets = [0, 64], sizes = [1, 32], strides = [1, 1]} : vector<1x128xf32> to vector<1x32xf32>
    %144 = vector.extract_strided_slice %140 {offsets = [0, 96], sizes = [1, 32], strides = [1, 1]} : vector<1x128xf32> to vector<1x32xf32>
    %145 = arith.mulf %142, %128 : vector<1x32xf32>
    %146 = arith.mulf %141, %143 : vector<1x32xf32>
    %147 = arith.addf %145, %146 : vector<1x32xf32>
    %148 = math.tanh %147 : vector<1x32xf32>
    %149 = arith.mulf %144, %148 : vector<1x32xf32>
    %150 = vector.extract_strided_slice %7 {offsets = [7, 0], sizes = [1, 128], strides = [1, 1]} : vector<8x128xf32> to vector<1x128xf32>
    %cst_24 = arith.constant dense<0.000000e+00> : vector<1x128xf32>
    %151 = tpu.matmul %149, %8, %cst_24 {dimension_numbers = #tpu.dot_dimension_numbers<[1], [0], [0], [1], [0, 0, 1, 1], [], []>} : vector<1x32xf32>, vector<32x128xf32>, vector<1x128xf32> -> vector<1x128xf32>
    %152 = arith.addf %150, %151 : vector<1x128xf32>
    %153 = math.tanh %152 : vector<1x128xf32>
    %154 = arith.negf %152 : vector<1x128xf32>
    %155 = math.exp %154 : vector<1x128xf32>
    %cst_25 = arith.constant 1.000000e+00 : f32
    %156 = vector.broadcast %cst_25 : f32 to vector<1x128xf32>
    %157 = arith.addf %156, %155 : vector<1x128xf32>
    %158 = arith.divf %156, %157 : vector<1x128xf32>
    %159 = arith.select %14, %153, %158 : vector<1x128xi1>, vector<1x128xf32>
    %160 = vector.extract_strided_slice %159 {offsets = [0, 0], sizes = [1, 32], strides = [1, 1]} : vector<1x128xf32> to vector<1x32xf32>
    %161 = vector.extract_strided_slice %159 {offsets = [0, 32], sizes = [1, 32], strides = [1, 1]} : vector<1x128xf32> to vector<1x32xf32>
    %162 = vector.extract_strided_slice %159 {offsets = [0, 64], sizes = [1, 32], strides = [1, 1]} : vector<1x128xf32> to vector<1x32xf32>
    %163 = vector.extract_strided_slice %159 {offsets = [0, 96], sizes = [1, 32], strides = [1, 1]} : vector<1x128xf32> to vector<1x32xf32>
    %164 = arith.mulf %161, %147 : vector<1x32xf32>
    %165 = arith.mulf %160, %162 : vector<1x32xf32>
    %166 = arith.addf %164, %165 : vector<1x32xf32>
    %167 = math.tanh %166 : vector<1x32xf32>
    %168 = arith.mulf %163, %167 : vector<1x32xf32>
    %169 = tpu.concatenate %35, %54, %73, %92, %111, %130, %149, %168 in 0 : vector<1x32xf32>, vector<1x32xf32>, vector<1x32xf32>, vector<1x32xf32>, vector<1x32xf32>, vector<1x32xf32>, vector<1x32xf32>, vector<1x32xf32> -> vector<8x32xf32>
    %c0_26 = arith.constant 0 : index
    %c0_27 = arith.constant 0 : index
    %170 = vector.load %arg4[%c0_26, %c0_27] : memref<32x5xf32, #tpu.memory_space<vmem>>, vector<32x5xf32>
    %cst_28 = arith.constant dense<0.000000e+00> : vector<8x5xf32>
    %171 = tpu.matmul %169, %170, %cst_28 {dimension_numbers = #tpu.dot_dimension_numbers<[1], [0], [0], [1], [0, 0, 1, 1], [], []>} : vector<8x32xf32>, vector<32x5xf32>, vector<8x5xf32> -> vector<8x5xf32>
    %c0_29 = arith.constant 0 : index
    %c0_30 = arith.constant 0 : index
    %172 = vector.load %arg5[%c0_29, %c0_30] : memref<1x5xf32, #tpu.memory_space<vmem>>, vector<1x5xf32>
    %173 = vector.broadcast %172 : vector<1x5xf32> to vector<8x5xf32>
    %174 = arith.addf %171, %173 : vector<8x5xf32>
    %c0_31 = arith.constant 0 : index
    %c0_32 = arith.constant 0 : index
    %175 = vector.load %arg8[%c0_31, %c0_32] : memref<8x5xf32, #tpu.memory_space<vmem>>, vector<8x5xf32>
    tpu.vector_store %arg8[%c0_31, %c0_32], %174 {strides = array<i32>} : memref<8x5xf32, #tpu.memory_space<vmem>>, vector<8x5xf32>,
    return
  }
}

</mosaic_0001>

<llo_original>
// kernel: lstm_forward.1
$region0: #{lstm_forward.1}
  #allocation0 [shape = 'u32[]', space=smem, size = 0x4, offset = 0x4, fixed_abs, tag = 'smem constant byte address 0x4 - core index']
  #allocation1 [shape = 'u32[144,128]{1,0:T(1,128)}', space=vmem, size = 0x12000, scoped, tag = 'internal scratch']
  %s0 = inlined_call_operand.vmem [shape: f32[8,1], index: 0, kind: input, shape index: {}]
  %s1 = inlined_call_operand.vmem [shape: f32[1,128], index: 1, kind: input, shape index: {}]
  %s2 = inlined_call_operand.vmem [shape: f32[32,128], index: 2, kind: input, shape index: {}]
  %s3 = inlined_call_operand.vmem [shape: f32[1,128], index: 3, kind: input, shape index: {}]
  %s4 = inlined_call_operand.vmem [shape: f32[32,5], index: 4, kind: input, shape index: {}]
  %s5 = inlined_call_operand.vmem [shape: f32[1,5], index: 5, kind: input, shape index: {}]
  %s6 = inlined_call_operand.vmem [shape: f32[1,32], index: 6, kind: input, shape index: {}]
  %s7 = inlined_call_operand.vmem [shape: f32[1,32], index: 7, kind: input, shape index: {}]
  %s8 = inlined_call_operand.hbm [shape: f32[8,5], index: 8, kind: output, shape index: {}]
  %s9 = sld [smem:[#allocation0]]
  $region42: #{lstm_forward.1} parent=0
    _
  %s11 = ssub.s32 1, %s9
  %s12 = scalar_select 0, %s11, %s9
  $region1: #{lstm_forward.1} parent=0
    #allocation2 [shape = 'u8[4096]{0}', space=vmem, size = 0x1000, scoped, tag = 'output window, operand 0, single buffered']
    #allocation3 [shape = 's32[1]{0}', space=sflag, size = 0x4, scoped, tag = 'scoped memory for lstm_forward.1']
    %13 = vsyncpa [#allocation3], 0
    // Predicated region
    $region2: #{lstm_forward.1} parent=1 // pred_check
      _
    $region3: #{lstm_forward.1} parent=1 // pred_check_branch
      %15 = sbr.rel (0) target = $region5
    $region4: #{lstm_forward.1} parent=1 // pred_region
      _
    $region5: #{lstm_forward.1} parent=1 // pred_fallthru
      _
    // Predicated region
    $region6: #{lstm_forward.1} parent=1 // pred_check
      _
    $region7: #{lstm_forward.1} parent=1 // pred_check_branch
      %17 = sbr.rel (0) target = $region9
    $region8: #{lstm_forward.1} parent=1 // pred_region
      _
    $region9: #{lstm_forward.1} parent=1 // pred_fallthru
      _
    // Predicated region
    $region10: #{lstm_forward.1} parent=1 // pred_check
      _
    $region11: #{lstm_forward.1} parent=1 // pred_check_branch
      %19 = sbr.rel (0) target = $region13
    $region12: #{lstm_forward.1} parent=1 // pred_region
      _
    $region13: #{lstm_forward.1} parent=1 // pred_fallthru
      _
    // Predicated region
    $region14: #{lstm_forward.1} parent=1 // pred_check
      _
    $region15: #{lstm_forward.1} parent=1 // pred_check_branch
      %21 = sbr.rel (0) target = $region17
    $region16: #{lstm_forward.1} parent=1 // pred_region
      _
    $region17: #{lstm_forward.1} parent=1 // pred_fallthru
      _
    // Predicated region
    $region18: #{lstm_forward.1} parent=1 // pred_check
      _
    $region19: #{lstm_forward.1} parent=1 // pred_check_branch
      %23 = sbr.rel (0) target = $region21
    $region20: #{lstm_forward.1} parent=1 // pred_region
      _
    $region21: #{lstm_forward.1} parent=1 // pred_fallthru
      _
    // Predicated region
    $region22: #{lstm_forward.1} parent=1 // pred_check
      _
    $region23: #{lstm_forward.1} parent=1 // pred_check_branch
      %25 = sbr.rel (0) target = $region25
    $region24: #{lstm_forward.1} parent=1 // pred_region
      _
    $region25: #{lstm_forward.1} parent=1 // pred_fallthru
      _
    // Predicated region
    $region26: #{lstm_forward.1} parent=1 // pred_check
      _
    $region27: #{lstm_forward.1} parent=1 // pred_check_branch
      %27 = sbr.rel (0) target = $region29
    $region28: #{lstm_forward.1} parent=1 // pred_region
      _
    $region29: #{lstm_forward.1} parent=1 // pred_fallthru
      _
    // Predicated region
    $region30: #{lstm_forward.1} parent=1 // pred_check
      _
    $region31: #{lstm_forward.1} parent=1 // pred_check_branch
      %29 = sbr.rel (0) target = $region33
    $region32: #{lstm_forward.1} parent=1 // pred_region
      _
    $region33: #{lstm_forward.1} parent=1 // pred_fallthru
      _
    %v30 = vld [vmem:[%s0] sm:$0xff]
    %v31 = vld [vmem:[%s1] sm:$0x1]
    %33 = vset.pattern.permute.xlu0 0
    %34 = vperm.xlu0 %33, %v30
    %v35 = vpop.permute.xlu0 %34
    %v38 = vlaneseq
    %v39 = vshrl.u32 %v38, 7
    %v40 = vsub.s32 0, %v39
    %v41 = vrot.slane %v31, %v40
    %v43 = vmul.f32 %v35, %v41
    %v44 = vld [vmem:[%s3] sm:$0x1]
    %v46 = vlaneseq
    %v47 = vshrl.u32 %v46, 7
    %v48 = vsub.s32 0, %v47
    %v49 = vrot.slane %v44, %v48
    %v51 = vadd.f32 %v43, %v49
    %v52 = vld [vmem:[%s2] sm:$0xff]
    %v53 = vld [vmem:[%s2 + $0x8] sm:$0xff]
    %v54 = vld [vmem:[%s2 + $0x10] sm:$0xff]
    %v55 = vld [vmem:[%s2 + $0x18] sm:$0xff]
    %v56 = vlaneseq
    %v57 = vand.u32 %v56, 127
    %vm58 = vcmp.ge.s32.totalorder %v57, 64
    %vm59 = vcmp.lt.s32.totalorder %v57, 96
    %vm60 = vmand %vm58, %vm59
    %v61 = vld [vmem:[%s6] sm:$0x1]
    %v62 = vld [vmem:[%s7] sm:$0x1]
    %vm63 = vcmask 261120
    %v65 = vsel %vm63, %v61, 0
    %67 = vmatprep.subr.mxu0 0.0
    %68 = vmatpush1.msra.mxu0 0.0
    %69 = vmatprep.subr.mxu0 0.0
    %70 = vmatpush1.msra.mxu0 0.0
    %71 = vmatprep.subr.mxu0 0.0
    %72 = vmatpush1.msra.mxu0 0.0
    %73 = vmatprep.subr.mxu0 0.0
    %74 = vmatpush1.msra.mxu0 0.0
    %75 = vmatprep.subr.mxu0 0.0
    %76 = vmatpush1.msra.mxu0 0.0
    %77 = vmatprep.subr.mxu0 0.0
    %78 = vmatpush1.msra.mxu0 0.0
    %79 = vmatprep.subr.mxu0 0.0
    %80 = vmatpush1.msra.mxu0 0.0
    %81 = vmatprep.subr.mxu0 0.0
    %82 = vmatpush1.msra.mxu0 0.0
    %83 = vmatprep.subr.mxu0 0.0
    %84 = vmatpush1.msra.mxu0 0.0
    %85 = vmatprep.subr.mxu0 0.0
    %86 = vmatpush1.msra.mxu0 0.0
    %87 = vmatprep.subr.mxu0 0.0
    %88 = vmatpush1.msra.mxu0 0.0
    %89 = vmatprep.subr.mxu0 0.0
    %90 = vmatpush1.msra.mxu0 0.0
    %91 = vmatprep.subr.mxu0 0.0
    %92 = vmatpush1.msra.mxu0 %v55
    %93 = vmatprep.subr.mxu0 0.0
    %94 = vmatpush1.msra.mxu0 %v54
    %95 = vmatprep.subr.mxu0 0.0
    %96 = vmatpush1.msra.mxu0 %v53
    %97 = vmatprep.subr.mxu0 0.0
    %98 = vmatpush1.msra.mxu0 %v52
    %99 = vmatprep.subr.mxu0 0.0
    %100 = vmatpush2.msra.mxu0 0.0
    %101 = vmatprep.subr.mxu0 0.0
    %102 = vmatpush2.msra.mxu0 0.0
    %103 = vmatprep.subr.mxu0 0.0
    %104 = vmatpush2.msra.mxu0 0.0
    %105 = vmatprep.subr.mxu0 0.0
    %106 = vmatpush2.msra.mxu0 0.0
    %107 = vmatprep.subr.mxu0 0.0
    %108 = vmatpush2.msra.mxu0 0.0
    %109 = vmatprep.subr.mxu0 0.0
    %110 = vmatpush2.msra.mxu0 0.0
    %111 = vmatprep.subr.mxu0 0.0
    %112 = vmatpush2.msra.mxu0 0.0
    %113 = vmatprep.subr.mxu0 0.0
    %114 = vmatpush2.msra.mxu0 0.0
    %115 = vmatprep.subr.mxu0 0.0
    %116 = vmatpush2.msra.mxu0 0.0
    %117 = vmatprep.subr.mxu0 0.0
    %118 = vmatpush2.msra.mxu0 0.0
    %119 = vmatprep.subr.mxu0 0.0
    %120 = vmatpush2.msra.mxu0 0.0
    %121 = vmatprep.subr.mxu0 0.0
    %122 = vmatpush2.msra.mxu0 0.0
    %123 = vmatprep.subr.mxu0 0.0
    %124 = vmatpush2.msra.mxu0 0.0
    %125 = vmatprep.subr.mxu0 0.0
    %126 = vmatpush2.msra.mxu0 0.0
    %127 = vmatprep.subr.mxu0 0.0
    %128 = vmatpush2.msra.mxu0 0.0
    %129 = vmatprep.subr.mxu0 0.0
    %130 = vmatpush2.msra.mxu0 0.0
    %131 = vmatprep.mubr.f32.mxu0 0.0
    %132 = vmatmul.mubr.f32.gmra.mxu0 %v65
    %v133 = vpop.f32.mrf.mxu0
    %v134 = vadd.f32 0.0, %v133
    %v135 = vpop.f32.mrf.mxu0
    %136 = vdwg.mxu0
    %v137 = vadd.f32 %v51, %v134
    %v138 = vtanh.pop %v137
    %v139 = vxor.u32 %v137, 2147483648
    %v140 = vmul.f32 %v139, 1.442695
    %v141 = vpow.pop %v140
    %v142 = vadd.f32 %v141, 1.0
    %v143 = vrcp.pop %v142
    %v144 = vmul.f32 1.0, %v143
    %v145 = vsel %vm60, %v138, %v144
    %v147 = vlaneseq
    %v148 = vshrl.u32 %v147, 7
    %v149 = vsub.s32 0, %v148
    %v150 = vrot.slane %v62, %v149
    %151 = vrot.lane.b32.xlu0 %v150, 32
    %v152 = vpop.permute.xlu0 %151
    %v154 = vmul.f32 %v145, %v152
    %156 = vrot.lane.b32.xlu0 %v145, 64
    %v157 = vpop.permute.xlu0 %156
    %v159 = vmul.f32 %v145, %v157
    %161 = vrot.lane.b32.xlu0 %v159, 32
    %v162 = vpop.permute.xlu0 %161
    %v164 = vadd.f32 %v154, %v162
    %v165 = vtanh.pop %v164
    %167 = vrot.lane.b32.xlu0 %v165, 64
    %v168 = vpop.permute.xlu0 %167
    %v170 = vmul.f32 %v145, %v168
    %172 = vrot.lane.b32.xlu0 %v170, 32
    %v173 = vpop.permute.xlu0 %172
    %v174 = vsel %vm63, %v173, 0
    %176 = vmatprep.subr.mxu0 0.0
    %177 = vmatpush1.msra.mxu0 0.0
    %178 = vmatprep.subr.mxu0 0.0
    %179 = vmatpush1.msra.mxu0 0.0
    %180 = vmatprep.subr.mxu0 0.0
    %181 = vmatpush1.msra.mxu0 0.0
    %182 = vmatprep.subr.mxu0 0.0
    %183 = vmatpush1.msra.mxu0 0.0
    %184 = vmatprep.subr.mxu0 0.0
    %185 = vmatpush1.msra.mxu0 0.0
    %186 = vmatprep.subr.mxu0 0.0
    %187 = vmatpush1.msra.mxu0 0.0
    %188 = vmatprep.subr.mxu0 0.0
    %189 = vmatpush1.msra.mxu0 0.0
    %190 = vmatprep.subr.mxu0 0.0
    %191 = vmatpush1.msra.mxu0 0.0
    %192 = vmatprep.subr.mxu0 0.0
    %193 = vmatpush1.msra.mxu0 0.0
    %194 = vmatprep.subr.mxu0 0.0
    %195 = vmatpush1.msra.mxu0 0.0
    %196 = vmatprep.subr.mxu0 0.0
    %197 = vmatpush1.msra.mxu0 0.0
    %198 = vmatprep.subr.mxu0 0.0
    %199 = vmatpush1.msra.mxu0 0.0
    %200 = vmatprep.subr.mxu0 0.0
    %201 = vmatpush1.msra.mxu0 %v55
    %202 = vmatprep.subr.mxu0 0.0
    %203 = vmatpush1.msra.mxu0 %v54
    %204 = vmatprep.subr.mxu0 0.0
    %205 = vmatpush1.msra.mxu0 %v53
    %206 = vmatprep.subr.mxu0 0.0
    %207 = vmatpush1.msra.mxu0 %v52
    %208 = vmatprep.subr.mxu0 0.0
    %209 = vmatpush2.msra.mxu0 0.0
    %210 = vmatprep.subr.mxu0 0.0
    %211 = vmatpush2.msra.mxu0 0.0
    %212 = vmatprep.subr.mxu0 0.0
    %213 = vmatpush2.msra.mxu0 0.0
    %214 = vmatprep.subr.mxu0 0.0
    %215 = vmatpush2.msra.mxu0 0.0
    %216 = vmatprep.subr.mxu0 0.0
    %217 = vmatpush2.msra.mxu0 0.0
    %218 = vmatprep.subr.mxu0 0.0
    %219 = vmatpush2.msra.mxu0 0.0
    %220 = vmatprep.subr.mxu0 0.0
    %221 = vmatpush2.msra.mxu0 0.0
    %222 = vmatprep.subr.mxu0 0.0
    %223 = vmatpush2.msra.mxu0 0.0
    %224 = vmatprep.subr.mxu0 0.0
    %225 = vmatpush2.msra.mxu0 0.0
    %226 = vmatprep.subr.mxu0 0.0
    %227 = vmatpush2.msra.mxu0 0.0
    %228 = vmatprep.subr.mxu0 0.0
    %229 = vmatpush2.msra.mxu0 0.0
    %230 = vmatprep.subr.mxu0 0.0
    %231 = vmatpush2.msra.mxu0 0.0
    %232 = vmatprep.subr.mxu0 0.0
    %233 = vmatpush2.msra.mxu0 0.0
    %234 = vmatprep.subr.mxu0 0.0
    %235 = vmatpush2.msra.mxu0 0.0
    %236 = vmatprep.subr.mxu0 0.0
    %237 = vmatpush2.msra.mxu0 0.0
    %238 = vmatprep.subr.mxu0 0.0
    %239 = vmatpush2.msra.mxu0 0.0
    %240 = vmatprep.mubr.f32.mxu0 0.0
    %241 = vmatmul.mubr.f32.gmra.mxu0 %v174
    %v242 = vpop.f32.mrf.mxu0
    %v243 = vadd.f32 0.0, %v242
    %v244 = vpop.f32.mrf.mxu0
    %245 = vdwg.mxu0
    %v247 = vrot.slane %v243, 7
    %v249 = vadd.f32 %v51, %v247
    %v250 = vtanh.pop %v249
    %v251 = vxor.u32 %v249, 2147483648
    %v252 = vmul.f32 %v251, 1.442695
    %v253 = vpow.pop %v252
    %v254 = vadd.f32 %v253, 1.0
    %v255 = vrcp.pop %v254
    %v256 = vmul.f32 1.0, %v255
    %v257 = vsel %vm60, %v250, %v256
    %v259 = vrot.slane %v164, 7
    %v261 = vmul.f32 %v257, %v259
    %263 = vrot.lane.b32.xlu0 %v257, 64
    %v264 = vpop.permute.xlu0 %263
    %v266 = vmul.f32 %v257, %v264
    %268 = vrot.lane.b32.xlu0 %v266, 32
    %v269 = vpop.permute.xlu0 %268
    %v271 = vadd.f32 %v261, %v269
    %v272 = vtanh.pop %v271
    %274 = vrot.lane.b32.xlu0 %v272, 64
    %v275 = vpop.permute.xlu0 %274
    %v277 = vmul.f32 %v257, %v275
    %v279 = vrot.slane %v277, 1
    %280 = vrot.lane.b32.xlu0 %v279, 32
    %v281 = vpop.permute.xlu0 %280
    %v282 = vsel %vm63, %v281, 0
    %284 = vmatprep.subr.mxu0 0.0
    %285 = vmatpush1.msra.mxu0 0.0
    %286 = vmatprep.subr.mxu0 0.0
    %287 = vmatpush1.msra.mxu0 0.0
    %288 = vmatprep.subr.mxu0 0.0
    %289 = vmatpush1.msra.mxu0 0.0
    %290 = vmatprep.subr.mxu0 0.0
    %291 = vmatpush1.msra.mxu0 0.0
    %292 = vmatprep.subr.mxu0 0.0
    %293 = vmatpush1.msra.mxu0 0.0
    %294 = vmatprep.subr.mxu0 0.0
    %295 = vmatpush1.msra.mxu0 0.0
    %296 = vmatprep.subr.mxu0 0.0
    %297 = vmatpush1.msra.mxu0 0.0
    %298 = vmatprep.subr.mxu0 0.0
    %299 = vmatpush1.msra.mxu0 0.0
    %300 = vmatprep.subr.mxu0 0.0
    %301 = vmatpush1.msra.mxu0 0.0
    %302 = vmatprep.subr.mxu0 0.0
    %303 = vmatpush1.msra.mxu0 0.0
    %304 = vmatprep.subr.mxu0 0.0
    %305 = vmatpush1.msra.mxu0 0.0
    %306 = vmatprep.subr.mxu0 0.0
    %307 = vmatpush1.msra.mxu0 0.0
    %308 = vmatprep.subr.mxu0 0.0
    %309 = vmatpush1.msra.mxu0 %v55
    %310 = vmatprep.subr.mxu0 0.0
    %311 = vmatpush1.msra.mxu0 %v54
    %312 = vmatprep.subr.mxu0 0.0
    %313 = vmatpush1.msra.mxu0 %v53
    %314 = vmatprep.subr.mxu0 0.0
    %315 = vmatpush1.msra.mxu0 %v52
    %316 = vmatprep.subr.mxu0 0.0
    %317 = vmatpush2.msra.mxu0 0.0
    %318 = vmatprep.subr.mxu0 0.0
    %319 = vmatpush2.msra.mxu0 0.0
    %320 = vmatprep.subr.mxu0 0.0
    %321 = vmatpush2.msra.mxu0 0.0
    %322 = vmatprep.subr.mxu0 0.0
    %323 = vmatpush2.msra.mxu0 0.0
    %324 = vmatprep.subr.mxu0 0.0
    %325 = vmatpush2.msra.mxu0 0.0
    %326 = vmatprep.subr.mxu0 0.0
    %327 = vmatpush2.msra.mxu0 0.0
    %328 = vmatprep.subr.mxu0 0.0
    %329 = vmatpush2.msra.mxu0 0.0
    %330 = vmatprep.subr.mxu0 0.0
    %331 = vmatpush2.msra.mxu0 0.0
    %332 = vmatprep.subr.mxu0 0.0
    %333 = vmatpush2.msra.mxu0 0.0
    %334 = vmatprep.subr.mxu0 0.0
    %335 = vmatpush2.msra.mxu0 0.0
    %336 = vmatprep.subr.mxu0 0.0
    %337 = vmatpush2.msra.mxu0 0.0
    %338 = vmatprep.subr.mxu0 0.0
    %339 = vmatpush2.msra.mxu0 0.0
    %340 = vmatprep.subr.mxu0 0.0
    %341 = vmatpush2.msra.mxu0 0.0
    %342 = vmatprep.subr.mxu0 0.0
    %343 = vmatpush2.msra.mxu0 0.0
    %344 = vmatprep.subr.mxu0 0.0
    %345 = vmatpush2.msra.mxu0 0.0
    %346 = vmatprep.subr.mxu0 0.0
    %347 = vmatpush2.msra.mxu0 0.0
    %348 = vmatprep.mubr.f32.mxu0 0.0
    %349 = vmatmul.mubr.f32.gmra.mxu0 %v282
    %v350 = vpop.f32.mrf.mxu0
    %v351 = vadd.f32 0.0, %v350
    %v352 = vpop.f32.mrf.mxu0
    %353 = vdwg.mxu0
    %v355 = vrot.slane %v351, 6
    %v357 = vadd.f32 %v51, %v355
    %v358 = vtanh.pop %v357
    %v359 = vxor.u32 %v357, 2147483648
    %v360 = vmul.f32 %v359, 1.442695
    %v361 = vpow.pop %v360
    %v362 = vadd.f32 %v361, 1.0
    %v363 = vrcp.pop %v362
    %v364 = vmul.f32 1.0, %v363
    %v365 = vsel %vm60, %v358, %v364
    %v367 = vrot.slane %v271, 7
    %v369 = vmul.f32 %v365, %v367
    %371 = vrot.lane.b32.xlu0 %v365, 64
    %v372 = vpop.permute.xlu0 %371
    %v374 = vmul.f32 %v365, %v372
    %376 = vrot.lane.b32.xlu0 %v374, 32
    %v377 = vpop.permute.xlu0 %376
    %v379 = vadd.f32 %v369, %v377
    %v380 = vtanh.pop %v379
    %382 = vrot.lane.b32.xlu0 %v380, 64
    %v383 = vpop.permute.xlu0 %382
    %v385 = vmul.f32 %v365, %v383
    %v387 = vrot.slane %v385, 2
    %388 = vrot.lane.b32.xlu0 %v387, 32
    %v389 = vpop.permute.xlu0 %388
    %v390 = vsel %vm63, %v389, 0
    %392 = vmatprep.subr.mxu0 0.0
    %393 = vmatpush1.msra.mxu0 0.0
    %394 = vmatprep.subr.mxu0 0.0
    %395 = vmatpush1.msra.mxu0 0.0
    %396 = vmatprep.subr.mxu0 0.0
    %397 = vmatpush1.msra.mxu0 0.0
    %398 = vmatprep.subr.mxu0 0.0
    %399 = vmatpush1.msra.mxu0 0.0
    %400 = vmatprep.subr.mxu0 0.0
    %401 = vmatpush1.msra.mxu0 0.0
    %402 = vmatprep.subr.mxu0 0.0
    %403 = vmatpush1.msra.mxu0 0.0
    %404 = vmatprep.subr.mxu0 0.0
    %405 = vmatpush1.msra.mxu0 0.0
    %406 = vmatprep.subr.mxu0 0.0
    %407 = vmatpush1.msra.mxu0 0.0
    %408 = vmatprep.subr.mxu0 0.0
    %409 = vmatpush1.msra.mxu0 0.0
    %410 = vmatprep.subr.mxu0 0.0
    %411 = vmatpush1.msra.mxu0 0.0
    %412 = vmatprep.subr.mxu0 0.0
    %413 = vmatpush1.msra.mxu0 0.0
    %414 = vmatprep.subr.mxu0 0.0
    %415 = vmatpush1.msra.mxu0 0.0
    %416 = vmatprep.subr.mxu0 0.0
    %417 = vmatpush1.msra.mxu0 %v55
    %418 = vmatprep.subr.mxu0 0.0
    %419 = vmatpush1.msra.mxu0 %v54
    %420 = vmatprep.subr.mxu0 0.0
    %421 = vmatpush1.msra.mxu0 %v53
    %422 = vmatprep.subr.mxu0 0.0
    %423 = vmatpush1.msra.mxu0 %v52
    %424 = vmatprep.subr.mxu0 0.0
    %425 = vmatpush2.msra.mxu0 0.0
    %426 = vmatprep.subr.mxu0 0.0
    %427 = vmatpush2.msra.mxu0 0.0
    %428 = vmatprep.subr.mxu0 0.0
    %429 = vmatpush2.msra.mxu0 0.0
    %430 = vmatprep.subr.mxu0 0.0
    %431 = vmatpush2.msra.mxu0 0.0
    %432 = vmatprep.subr.mxu0 0.0
    %433 = vmatpush2.msra.mxu0 0.0
    %434 = vmatprep.subr.mxu0 0.0
    %435 = vmatpush2.msra.mxu0 0.0
    %436 = vmatprep.subr.mxu0 0.0
    %437 = vmatpush2.msra.mxu0 0.0
    %438 = vmatprep.subr.mxu0 0.0
    %439 = vmatpush2.msra.mxu0 0.0
    %440 = vmatprep.subr.mxu0 0.0
    %441 = vmatpush2.msra.mxu0 0.0
    %442 = vmatprep.subr.mxu0 0.0
    %443 = vmatpush2.msra.mxu0 0.0
    %444 = vmatprep.subr.mxu0 0.0
    %445 = vmatpush2.msra.mxu0 0.0
    %446 = vmatprep.subr.mxu0 0.0
    %447 = vmatpush2.msra.mxu0 0.0
    %448 = vmatprep.subr.mxu0 0.0
    %449 = vmatpush2.msra.mxu0 0.0
    %450 = vmatprep.subr.mxu0 0.0
    %451 = vmatpush2.msra.mxu0 0.0
    %452 = vmatprep.subr.mxu0 0.0
    %453 = vmatpush2.msra.mxu0 0.0
    %454 = vmatprep.subr.mxu0 0.0
    %455 = vmatpush2.msra.mxu0 0.0
    %456 = vmatprep.mubr.f32.mxu0 0.0
    %457 = vmatmul.mubr.f32.gmra.mxu0 %v390
    %v458 = vpop.f32.mrf.mxu0
    %v459 = vadd.f32 0.0, %v458
    %v460 = vpop.f32.mrf.mxu0
    %461 = vdwg.mxu0
    %v463 = vrot.slane %v459, 5
    %v465 = vadd.f32 %v51, %v463
    %v466 = vtanh.pop %v465
    %v467 = vxor.u32 %v465, 2147483648
    %v468 = vmul.f32 %v467, 1.442695
    %v469 = vpow.pop %v468
    %v470 = vadd.f32 %v469, 1.0
    %v471 = vrcp.pop %v470
    %v472 = vmul.f32 1.0, %v471
    %v473 = vsel %vm60, %v466, %v472
    %v475 = vrot.slane %v379, 7
    %v477 = vmul.f32 %v473, %v475
    %479 = vrot.lane.b32.xlu0 %v473, 64
    %v480 = vpop.permute.xlu0 %479
    %v482 = vmul.f32 %v473, %v480
    %484 = vrot.lane.b32.xlu0 %v482, 32
    %v485 = vpop.permute.xlu0 %484
    %v487 = vadd.f32 %v477, %v485
    %v488 = vtanh.pop %v487
    %490 = vrot.lane.b32.xlu0 %v488, 64
    %v491 = vpop.permute.xlu0 %490
    %v493 = vmul.f32 %v473, %v491
    %v495 = vrot.slane %v493, 3
    %496 = vrot.lane.b32.xlu0 %v495, 32
    %v497 = vpop.permute.xlu0 %496
    %v498 = vsel %vm63, %v497, 0
    %500 = vmatprep.subr.mxu0 0.0
    %501 = vmatpush1.msra.mxu0 0.0
    %502 = vmatprep.subr.mxu0 0.0
    %503 = vmatpush1.msra.mxu0 0.0
    %504 = vmatprep.subr.mxu0 0.0
    %505 = vmatpush1.msra.mxu0 0.0
    %506 = vmatprep.subr.mxu0 0.0
    %507 = vmatpush1.msra.mxu0 0.0
    %508 = vmatprep.subr.mxu0 0.0
    %509 = vmatpush1.msra.mxu0 0.0
    %510 = vmatprep.subr.mxu0 0.0
    %511 = vmatpush1.msra.mxu0 0.0
    %512 = vmatprep.subr.mxu0 0.0
    %513 = vmatpush1.msra.mxu0 0.0
    %514 = vmatprep.subr.mxu0 0.0
    %515 = vmatpush1.msra.mxu0 0.0
    %516 = vmatprep.subr.mxu0 0.0
    %517 = vmatpush1.msra.mxu0 0.0
    %518 = vmatprep.subr.mxu0 0.0
    %519 = vmatpush1.msra.mxu0 0.0
    %520 = vmatprep.subr.mxu0 0.0
    %521 = vmatpush1.msra.mxu0 0.0
    %522 = vmatprep.subr.mxu0 0.0
    %523 = vmatpush1.msra.mxu0 0.0
    %524 = vmatprep.subr.mxu0 0.0
    %525 = vmatpush1.msra.mxu0 %v55
    %526 = vmatprep.subr.mxu0 0.0
    %527 = vmatpush1.msra.mxu0 %v54
    %528 = vmatprep.subr.mxu0 0.0
    %529 = vmatpush1.msra.mxu0 %v53
    %530 = vmatprep.subr.mxu0 0.0
    %531 = vmatpush1.msra.mxu0 %v52
    %532 = vmatprep.subr.mxu0 0.0
    %533 = vmatpush2.msra.mxu0 0.0
    %534 = vmatprep.subr.mxu0 0.0
    %535 = vmatpush2.msra.mxu0 0.0
    %536 = vmatprep.subr.mxu0 0.0
    %537 = vmatpush2.msra.mxu0 0.0
    %538 = vmatprep.subr.mxu0 0.0
    %539 = vmatpush2.msra.mxu0 0.0
    %540 = vmatprep.subr.mxu0 0.0
    %541 = vmatpush2.msra.mxu0 0.0
    %542 = vmatprep.subr.mxu0 0.0
    %543 = vmatpush2.msra.mxu0 0.0
    %544 = vmatprep.subr.mxu0 0.0
    %545 = vmatpush2.msra.mxu0 0.0
    %546 = vmatprep.subr.mxu0 0.0
    %547 = vmatpush2.msra.mxu0 0.0
    %548 = vmatprep.subr.mxu0 0.0
    %549 = vmatpush2.msra.mxu0 0.0
    %550 = vmatprep.subr.mxu0 0.0
    %551 = vmatpush2.msra.mxu0 0.0
    %552 = vmatprep.subr.mxu0 0.0
    %553 = vmatpush2.msra.mxu0 0.0
    %554 = vmatprep.subr.mxu0 0.0
    %555 = vmatpush2.msra.mxu0 0.0
    %556 = vmatprep.subr.mxu0 0.0
    %557 = vmatpush2.msra.mxu0 0.0
    %558 = vmatprep.subr.mxu0 0.0
    %559 = vmatpush2.msra.mxu0 0.0
    %560 = vmatprep.subr.mxu0 0.0
    %561 = vmatpush2.msra.mxu0 0.0
    %562 = vmatprep.subr.mxu0 0.0
    %563 = vmatpush2.msra.mxu0 0.0
    %564 = vmatprep.mubr.f32.mxu0 0.0
    %565 = vmatmul.mubr.f32.gmra.mxu0 %v498
    %v566 = vpop.f32.mrf.mxu0
    %v567 = vadd.f32 0.0, %v566
    %v568 = vpop.f32.mrf.mxu0
    %569 = vdwg.mxu0
    %v571 = vrot.slane %v567, 4
    %v573 = vadd.f32 %v51, %v571
    %v574 = vtanh.pop %v573
    %v575 = vxor.u32 %v573, 2147483648
    %v576 = vmul.f32 %v575, 1.442695
    %v577 = vpow.pop %v576
    %v578 = vadd.f32 %v577, 1.0
    %v579 = vrcp.pop %v578
    %v580 = vmul.f32 1.0, %v579
    %v581 = vsel %vm60, %v574, %v580
    %v583 = vrot.slane %v487, 7
    %v585 = vmul.f32 %v581, %v583
    %587 = vrot.lane.b32.xlu0 %v581, 64
    %v588 = vpop.permute.xlu0 %587
    %v590 = vmul.f32 %v581, %v588
    %592 = vrot.lane.b32.xlu0 %v590, 32
    %v593 = vpop.permute.xlu0 %592
    %v595 = vadd.f32 %v585, %v593
    %v596 = vtanh.pop %v595
    %598 = vrot.lane.b32.xlu0 %v596, 64
    %v599 = vpop.permute.xlu0 %598
    %v601 = vmul.f32 %v581, %v599
    %v603 = vrot.slane %v601, 4
    %604 = vrot.lane.b32.xlu0 %v603, 32
    %v605 = vpop.permute.xlu0 %604
    %v606 = vsel %vm63, %v605, 0
    %608 = vmatprep.subr.mxu0 0.0
    %609 = vmatpush1.msra.mxu0 0.0
    %610 = vmatprep.subr.mxu0 0.0
    %611 = vmatpush1.msra.mxu0 0.0
    %612 = vmatprep.subr.mxu0 0.0
    %613 = vmatpush1.msra.mxu0 0.0
    %614 = vmatprep.subr.mxu0 0.0
    %615 = vmatpush1.msra.mxu0 0.0
    %616 = vmatprep.subr.mxu0 0.0
    %617 = vmatpush1.msra.mxu0 0.0
    %618 = vmatprep.subr.mxu0 0.0
    %619 = vmatpush1.msra.mxu0 0.0
    %620 = vmatprep.subr.mxu0 0.0
    %621 = vmatpush1.msra.mxu0 0.0
    %622 = vmatprep.subr.mxu0 0.0
    %623 = vmatpush1.msra.mxu0 0.0
    %624 = vmatprep.subr.mxu0 0.0
    %625 = vmatpush1.msra.mxu0 0.0
    %626 = vmatprep.subr.mxu0 0.0
    %627 = vmatpush1.msra.mxu0 0.0
    %628 = vmatprep.subr.mxu0 0.0
    %629 = vmatpush1.msra.mxu0 0.0
    %630 = vmatprep.subr.mxu0 0.0
    %631 = vmatpush1.msra.mxu0 0.0
    %632 = vmatprep.subr.mxu0 0.0
    %633 = vmatpush1.msra.mxu0 %v55
    %634 = vmatprep.subr.mxu0 0.0
    %635 = vmatpush1.msra.mxu0 %v54
    %636 = vmatprep.subr.mxu0 0.0
    %637 = vmatpush1.msra.mxu0 %v53
    %638 = vmatprep.subr.mxu0 0.0
    %639 = vmatpush1.msra.mxu0 %v52
    %640 = vmatprep.subr.mxu0 0.0
    %641 = vmatpush2.msra.mxu0 0.0
    %642 = vmatprep.subr.mxu0 0.0
    %643 = vmatpush2.msra.mxu0 0.0
    %644 = vmatprep.subr.mxu0 0.0
    %645 = vmatpush2.msra.mxu0 0.0
    %646 = vmatprep.subr.mxu0 0.0
    %647 = vmatpush2.msra.mxu0 0.0
    %648 = vmatprep.subr.mxu0 0.0
    %649 = vmatpush2.msra.mxu0 0.0
    %650 = vmatprep.subr.mxu0 0.0
    %651 = vmatpush2.msra.mxu0 0.0
    %652 = vmatprep.subr.mxu0 0.0
    %653 = vmatpush2.msra.mxu0 0.0
    %654 = vmatprep.subr.mxu0 0.0
    %655 = vmatpush2.msra.mxu0 0.0
    %656 = vmatprep.subr.mxu0 0.0
    %657 = vmatpush2.msra.mxu0 0.0
    %658 = vmatprep.subr.mxu0 0.0
    %659 = vmatpush2.msra.mxu0 0.0
    %660 = vmatprep.subr.mxu0 0.0
    %661 = vmatpush2.msra.mxu0 0.0
    %662 = vmatprep.subr.mxu0 0.0
    %663 = vmatpush2.msra.mxu0 0.0
    %664 = vmatprep.subr.mxu0 0.0
    %665 = vmatpush2.msra.mxu0 0.0
    %666 = vmatprep.subr.mxu0 0.0
    %667 = vmatpush2.msra.mxu0 0.0
    %668 = vmatprep.subr.mxu0 0.0
    %669 = vmatpush2.msra.mxu0 0.0
    %670 = vmatprep.subr.mxu0 0.0
    %671 = vmatpush2.msra.mxu0 0.0
    %672 = vmatprep.mubr.f32.mxu0 0.0
    %673 = vmatmul.mubr.f32.gmra.mxu0 %v606
    %v674 = vpop.f32.mrf.mxu0
    %v675 = vadd.f32 0.0, %v674
    %v676 = vpop.f32.mrf.mxu0
    %677 = vdwg.mxu0
    %v679 = vrot.slane %v675, 3
    %v681 = vadd.f32 %v51, %v679
    %v682 = vtanh.pop %v681
    %v683 = vxor.u32 %v681, 2147483648
    %v684 = vmul.f32 %v683, 1.442695
    %v685 = vpow.pop %v684
    %v686 = vadd.f32 %v685, 1.0
    %v687 = vrcp.pop %v686
    %v688 = vmul.f32 1.0, %v687
    %v689 = vsel %vm60, %v682, %v688
    %v691 = vrot.slane %v595, 7
    %v693 = vmul.f32 %v689, %v691
    %695 = vrot.lane.b32.xlu0 %v689, 64
    %v696 = vpop.permute.xlu0 %695
    %v698 = vmul.f32 %v689, %v696
    %700 = vrot.lane.b32.xlu0 %v698, 32
    %v701 = vpop.permute.xlu0 %700
    %v703 = vadd.f32 %v693, %v701
    %v704 = vtanh.pop %v703
    %706 = vrot.lane.b32.xlu0 %v704, 64
    %v707 = vpop.permute.xlu0 %706
    %v709 = vmul.f32 %v689, %v707
    %v711 = vrot.slane %v709, 5
    %712 = vrot.lane.b32.xlu0 %v711, 32
    %v713 = vpop.permute.xlu0 %712
    %v714 = vsel %vm63, %v713, 0
    %716 = vmatprep.subr.mxu0 0.0
    %717 = vmatpush1.msra.mxu0 0.0
    %718 = vmatprep.subr.mxu0 0.0
    %719 = vmatpush1.msra.mxu0 0.0
    %720 = vmatprep.subr.mxu0 0.0
    %721 = vmatpush1.msra.mxu0 0.0
    %722 = vmatprep.subr.mxu0 0.0
    %723 = vmatpush1.msra.mxu0 0.0
    %724 = vmatprep.subr.mxu0 0.0
    %725 = vmatpush1.msra.mxu0 0.0
    %726 = vmatprep.subr.mxu0 0.0
    %727 = vmatpush1.msra.mxu0 0.0
    %728 = vmatprep.subr.mxu0 0.0
    %729 = vmatpush1.msra.mxu0 0.0
    %730 = vmatprep.subr.mxu0 0.0
    %731 = vmatpush1.msra.mxu0 0.0
    %732 = vmatprep.subr.mxu0 0.0
    %733 = vmatpush1.msra.mxu0 0.0
    %734 = vmatprep.subr.mxu0 0.0
    %735 = vmatpush1.msra.mxu0 0.0
    %736 = vmatprep.subr.mxu0 0.0
    %737 = vmatpush1.msra.mxu0 0.0
    %738 = vmatprep.subr.mxu0 0.0
    %739 = vmatpush1.msra.mxu0 0.0
    %740 = vmatprep.subr.mxu0 0.0
    %741 = vmatpush1.msra.mxu0 %v55
    %742 = vmatprep.subr.mxu0 0.0
    %743 = vmatpush1.msra.mxu0 %v54
    %744 = vmatprep.subr.mxu0 0.0
    %745 = vmatpush1.msra.mxu0 %v53
    %746 = vmatprep.subr.mxu0 0.0
    %747 = vmatpush1.msra.mxu0 %v52
    %748 = vmatprep.subr.mxu0 0.0
    %749 = vmatpush2.msra.mxu0 0.0
    %750 = vmatprep.subr.mxu0 0.0
    %751 = vmatpush2.msra.mxu0 0.0
    %752 = vmatprep.subr.mxu0 0.0
    %753 = vmatpush2.msra.mxu0 0.0
    %754 = vmatprep.subr.mxu0 0.0
    %755 = vmatpush2.msra.mxu0 0.0
    %756 = vmatprep.subr.mxu0 0.0
    %757 = vmatpush2.msra.mxu0 0.0
    %758 = vmatprep.subr.mxu0 0.0
    %759 = vmatpush2.msra.mxu0 0.0
    %760 = vmatprep.subr.mxu0 0.0
    %761 = vmatpush2.msra.mxu0 0.0
    %762 = vmatprep.subr.mxu0 0.0
    %763 = vmatpush2.msra.mxu0 0.0
    %764 = vmatprep.subr.mxu0 0.0
    %765 = vmatpush2.msra.mxu0 0.0
    %766 = vmatprep.subr.mxu0 0.0
    %767 = vmatpush2.msra.mxu0 0.0
    %768 = vmatprep.subr.mxu0 0.0
    %769 = vmatpush2.msra.mxu0 0.0
    %770 = vmatprep.subr.mxu0 0.0
    %771 = vmatpush2.msra.mxu0 0.0
    %772 = vmatprep.subr.mxu0 0.0
    %773 = vmatpush2.msra.mxu0 0.0
    %774 = vmatprep.subr.mxu0 0.0
    %775 = vmatpush2.msra.mxu0 0.0
    %776 = vmatprep.subr.mxu0 0.0
    %777 = vmatpush2.msra.mxu0 0.0
    %778 = vmatprep.subr.mxu0 0.0
    %779 = vmatpush2.msra.mxu0 0.0
    %780 = vmatprep.mubr.f32.mxu0 0.0
    %781 = vmatmul.mubr.f32.gmra.mxu0 %v714
    %v782 = vpop.f32.mrf.mxu0
    %v783 = vadd.f32 0.0, %v782
    %v784 = vpop.f32.mrf.mxu0
    %785 = vdwg.mxu0
    %v787 = vrot.slane %v783, 2
    %v789 = vadd.f32 %v51, %v787
    %v790 = vtanh.pop %v789
    %v791 = vxor.u32 %v789, 2147483648
    %v792 = vmul.f32 %v791, 1.442695
    %v793 = vpow.pop %v792
    %v794 = vadd.f32 %v793, 1.0
    %v795 = vrcp.pop %v794
    %v796 = vmul.f32 1.0, %v795
    %v797 = vsel %vm60, %v790, %v796
    %v799 = vrot.slane %v703, 7
    %v801 = vmul.f32 %v797, %v799
    %803 = vrot.lane.b32.xlu0 %v797, 64
    %v804 = vpop.permute.xlu0 %803
    %v806 = vmul.f32 %v797, %v804
    %808 = vrot.lane.b32.xlu0 %v806, 32
    %v809 = vpop.permute.xlu0 %808
    %v811 = vadd.f32 %v801, %v809
    %v812 = vtanh.pop %v811
    %814 = vrot.lane.b32.xlu0 %v812, 64
    %v815 = vpop.permute.xlu0 %814
    %v817 = vmul.f32 %v797, %v815
    %v819 = vrot.slane %v817, 6
    %820 = vrot.lane.b32.xlu0 %v819, 32
    %v821 = vpop.permute.xlu0 %820
    %v822 = vsel %vm63, %v821, 0
    %824 = vmatprep.subr.mxu0 0.0
    %825 = vmatpush1.msra.mxu0 0.0
    %826 = vmatprep.subr.mxu0 0.0
    %827 = vmatpush1.msra.mxu0 0.0
    %828 = vmatprep.subr.mxu0 0.0
    %829 = vmatpush1.msra.mxu0 0.0
    %830 = vmatprep.subr.mxu0 0.0
    %831 = vmatpush1.msra.mxu0 0.0
    %832 = vmatprep.subr.mxu0 0.0
    %833 = vmatpush1.msra.mxu0 0.0
    %834 = vmatprep.subr.mxu0 0.0
    %835 = vmatpush1.msra.mxu0 0.0
    %836 = vmatprep.subr.mxu0 0.0
    %837 = vmatpush1.msra.mxu0 0.0
    %838 = vmatprep.subr.mxu0 0.0
    %839 = vmatpush1.msra.mxu0 0.0
    %840 = vmatprep.subr.mxu0 0.0
    %841 = vmatpush1.msra.mxu0 0.0
    %842 = vmatprep.subr.mxu0 0.0
    %843 = vmatpush1.msra.mxu0 0.0
    %844 = vmatprep.subr.mxu0 0.0
    %845 = vmatpush1.msra.mxu0 0.0
    %846 = vmatprep.subr.mxu0 0.0
    %847 = vmatpush1.msra.mxu0 0.0
    %848 = vmatprep.subr.mxu0 0.0
    %849 = vmatpush1.msra.mxu0 %v55
    %850 = vmatprep.subr.mxu0 0.0
    %851 = vmatpush1.msra.mxu0 %v54
    %852 = vmatprep.subr.mxu0 0.0
    %853 = vmatpush1.msra.mxu0 %v53
    %854 = vmatprep.subr.mxu0 0.0
    %855 = vmatpush1.msra.mxu0 %v52
    %856 = vmatprep.subr.mxu0 0.0
    %857 = vmatpush2.msra.mxu0 0.0
    %858 = vmatprep.subr.mxu0 0.0
    %859 = vmatpush2.msra.mxu0 0.0
    %860 = vmatprep.subr.mxu0 0.0
    %861 = vmatpush2.msra.mxu0 0.0
    %862 = vmatprep.subr.mxu0 0.0
    %863 = vmatpush2.msra.mxu0 0.0
    %864 = vmatprep.subr.mxu0 0.0
    %865 = vmatpush2.msra.mxu0 0.0
    %866 = vmatprep.subr.mxu0 0.0
    %867 = vmatpush2.msra.mxu0 0.0
    %868 = vmatprep.subr.mxu0 0.0
    %869 = vmatpush2.msra.mxu0 0.0
    %870 = vmatprep.subr.mxu0 0.0
    %871 = vmatpush2.msra.mxu0 0.0
    %872 = vmatprep.subr.mxu0 0.0
    %873 = vmatpush2.msra.mxu0 0.0
    %874 = vmatprep.subr.mxu0 0.0
    %875 = vmatpush2.msra.mxu0 0.0
    %876 = vmatprep.subr.mxu0 0.0
    %877 = vmatpush2.msra.mxu0 0.0
    %878 = vmatprep.subr.mxu0 0.0
    %879 = vmatpush2.msra.mxu0 0.0
    %880 = vmatprep.subr.mxu0 0.0
    %881 = vmatpush2.msra.mxu0 0.0
    %882 = vmatprep.subr.mxu0 0.0
    %883 = vmatpush2.msra.mxu0 0.0
    %884 = vmatprep.subr.mxu0 0.0
    %885 = vmatpush2.msra.mxu0 0.0
    %886 = vmatprep.subr.mxu0 0.0
    %887 = vmatpush2.msra.mxu0 0.0
    %888 = vmatprep.mubr.f32.mxu0 0.0
    %889 = vmatmul.mubr.f32.gmra.mxu0 %v822
    %v890 = vpop.f32.mrf.mxu0
    %v891 = vadd.f32 0.0, %v890
    %v892 = vpop.f32.mrf.mxu0
    %893 = vdwg.mxu0
    %v895 = vrot.slane %v891, 1
    %v897 = vadd.f32 %v51, %v895
    %v898 = vtanh.pop %v897
    %v899 = vxor.u32 %v897, 2147483648
    %v900 = vmul.f32 %v899, 1.442695
    %v901 = vpow.pop %v900
    %v902 = vadd.f32 %v901, 1.0
    %v903 = vrcp.pop %v902
    %v904 = vmul.f32 1.0, %v903
    %v905 = vsel %vm60, %v898, %v904
    %v907 = vrot.slane %v811, 7
    %v909 = vmul.f32 %v905, %v907
    %911 = vrot.lane.b32.xlu0 %v905, 64
    %v912 = vpop.permute.xlu0 %911
    %v914 = vmul.f32 %v905, %v912
    %916 = vrot.lane.b32.xlu0 %v914, 32
    %v917 = vpop.permute.xlu0 %916
    %v919 = vadd.f32 %v909, %v917
    %v920 = vtanh.pop %v919
    %922 = vrot.lane.b32.xlu0 %v920, 64
    %v923 = vpop.permute.xlu0 %922
    %v925 = vmul.f32 %v905, %v923
    %vm926 = vcmask 1040384
    %v927 = vsel %vm926, %v170, %v277
    %vm928 = vcmask 1041408
    %v929 = vsel %vm928, %v927, %v385
    %vm930 = vcmask 1042432
    %v931 = vsel %vm930, %v929, %v493
    %vm932 = vcmask 1043456
    %v933 = vsel %vm932, %v931, %v601
    %vm934 = vcmask 1044480
    %v935 = vsel %vm934, %v933, %v709
    %vm936 = vcmask 1045504
    %v937 = vsel %vm936, %v935, %v817
    %vm938 = vcmask 1046528
    %v939 = vsel %vm938, %v937, %v925
    %v940 = vld [vmem:[%s4] sm:$0xff]
    %v941 = vld [vmem:[%s4 + $0x8] sm:$0xff]
    %v942 = vld [vmem:[%s4 + $0x10] sm:$0xff]
    %v943 = vld [vmem:[%s4 + $0x18] sm:$0xff]
    %v944 = vld [vmem:[%s5] sm:$0x1]
    %v946 = vlaneseq
    %v947 = vshrl.u32 %v946, 7
    %v948 = vsub.s32 0, %v947
    %v949 = vrot.slane %v944, %v948
    %952 = vrot.lane.b32.xlu0 %v939, 32
    %v953 = vpop.permute.xlu0 %952
    %v954 = vsel %vm63, %v953, 0
    %956 = vmatprep.subr.mxu0 0.0
    %957 = vmatpush1.msra.mxu0 0.0
    %958 = vmatprep.subr.mxu0 0.0
    %959 = vmatpush1.msra.mxu0 0.0
    %960 = vmatprep.subr.mxu0 0.0
    %961 = vmatpush1.msra.mxu0 0.0
    %962 = vmatprep.subr.mxu0 0.0
    %963 = vmatpush1.msra.mxu0 0.0
    %964 = vmatprep.subr.mxu0 0.0
    %965 = vmatpush1.msra.mxu0 0.0
    %966 = vmatprep.subr.mxu0 0.0
    %967 = vmatpush1.msra.mxu0 0.0
    %968 = vmatprep.subr.mxu0 0.0
    %969 = vmatpush1.msra.mxu0 0.0
    %970 = vmatprep.subr.mxu0 0.0
    %971 = vmatpush1.msra.mxu0 0.0
    %972 = vmatprep.subr.mxu0 0.0
    %973 = vmatpush1.msra.mxu0 0.0
    %974 = vmatprep.subr.mxu0 0.0
    %975 = vmatpush1.msra.mxu0 0.0
    %976 = vmatprep.subr.mxu0 0.0
    %977 = vmatpush1.msra.mxu0 0.0
    %978 = vmatprep.subr.mxu0 0.0
    %979 = vmatpush1.msra.mxu0 0.0
    %980 = vmatprep.subr.mxu0 0.0
    %981 = vmatpush1.msra.mxu0 %v943
    %982 = vmatprep.subr.mxu0 0.0
    %983 = vmatpush1.msra.mxu0 %v942
    %984 = vmatprep.subr.mxu0 0.0
    %985 = vmatpush1.msra.mxu0 %v941
    %986 = vmatprep.subr.mxu0 0.0
    %987 = vmatpush1.msra.mxu0 %v940
    %988 = vmatprep.subr.mxu0 0.0
    %989 = vmatpush2.msra.mxu0 0.0
    %990 = vmatprep.subr.mxu0 0.0
    %991 = vmatpush2.msra.mxu0 0.0
    %992 = vmatprep.subr.mxu0 0.0
    %993 = vmatpush2.msra.mxu0 0.0
    %994 = vmatprep.subr.mxu0 0.0
    %995 = vmatpush2.msra.mxu0 0.0
    %996 = vmatprep.subr.mxu0 0.0
    %997 = vmatpush2.msra.mxu0 0.0
    %998 = vmatprep.subr.mxu0 0.0
    %999 = vmatpush2.msra.mxu0 0.0
    %1000 = vmatprep.subr.mxu0 0.0
    %1001 = vmatpush2.msra.mxu0 0.0
    %1002 = vmatprep.subr.mxu0 0.0
    %1003 = vmatpush2.msra.mxu0 0.0
    %1004 = vmatprep.subr.mxu0 0.0
    %1005 = vmatpush2.msra.mxu0 0.0
    %1006 = vmatprep.subr.mxu0 0.0
    %1007 = vmatpush2.msra.mxu0 0.0
    %1008 = vmatprep.subr.mxu0 0.0
    %1009 = vmatpush2.msra.mxu0 0.0
    %1010 = vmatprep.subr.mxu0 0.0
    %1011 = vmatpush2.msra.mxu0 0.0
    %1012 = vmatprep.subr.mxu0 0.0
    %1013 = vmatpush2.msra.mxu0 0.0
    %1014 = vmatprep.subr.mxu0 0.0
    %1015 = vmatpush2.msra.mxu0 0.0
    %1016 = vmatprep.subr.mxu0 0.0
    %1017 = vmatpush2.msra.mxu0 0.0
    %1018 = vmatprep.subr.mxu0 0.0
    %1019 = vmatpush2.msra.mxu0 0.0
    %1020 = vmatprep.mubr.f32.mxu0 0.0
    %1021 = vmatmul.mubr.f32.gmra.mxu0 %v954
    %v1022 = vpop.f32.mrf.mxu0
    %v1023 = vadd.f32 %v949, %v1022
    %v1024 = vpop.f32.mrf.mxu0
    %1025 = vdwg.mxu0
    %vm1026 = vcmask 39936
    %1027 = vst.msk [vmem:[#allocation2] sm:$0xff] %vm1026, %v1023
    // Predicated region
    $region34: #{lstm_forward.1} parent=1 // pred_check
      _
    $region35: #{lstm_forward.1} parent=1 // pred_check_branch
      %1029 = sbr.rel (0) target = $region37
    $region36: #{lstm_forward.1} parent=1 // pred_region
      %s1031 = ssub.s32 128, 128
      %1032 = vsyncadd [#allocation3], %s1031
      %s1034 = sshll.u32 [#allocation2], 4
      %s1035 = int_to_ptr.vmem [resolvable:$true] %s1034
      %1037 = dma.vmem_to_hbm [thread:$0]  %s1035, 128, %s8, [#allocation3]
    $region37: #{lstm_forward.1} parent=1 // pred_fallthru
      _
    // Predicated region
    $region38: #{lstm_forward.1} parent=1 // pred_check
      _
    $region39: #{lstm_forward.1} parent=1 // pred_check_branch
      %1039 = sbr.rel (0) target = $region41
    $region40: #{lstm_forward.1} parent=1 // pred_region
      %1040 = dma.done [#allocation3], 128
    $region41: #{lstm_forward.1} parent=1 // pred_fallthru
      _
    %1041 = vsyncpa [#allocation3], 1

</llo_original>
